<compile_context>
chip_gen: v7x
topology: tpu7x:2x2x1
jax: 0.10.0
libtpu: 0.0.40
codegen_flags: <defaults>
</compile_context>

<pallas_src>
import functools

import jax
import jax.numpy as jnp
from jax.experimental import pallas as pl
from jax.experimental.pallas import tpu as pltpu


def _make_conv_kernel(H, W, K, Cin, Ct, Hp, Wp):
    """Builds the per-batch conv kernel body (static shapes closed over)."""
    WCt = W * Ct
    WpCin = Wp * Cin

    def conv_kernel(x_ref, w_ref, b_ref, o_ref):
        # x_ref: (1, Hp, Wp*Cin) bf16  -- one reflection-padded image,
        #                                 (W, Cin) flattened onto the lane axis
        # w_ref: (K, Wp*Cin, W*Ct) bf16 -- banded (Toeplitz) weight slabs, one per kh
        # b_ref: (1, W*Ct) f32          -- bias tiled along W
        # o_ref: (1, H, W*Ct) f32       -- lane-dense conv output
        #
        # Init accumulator with the broadcast bias (saves a zero-fill + add pass).
        acc = jnp.broadcast_to(b_ref[...], (H, WCt)).astype(jnp.float32)
        for kh in range(K):  # K static taps; each is one MXU matmul, contraction Wp*Cin
            patch = x_ref[0, kh:kh + H, :]          # sublane-shifted view, no relayout
            acc = acc + jnp.dot(patch, w_ref[kh],
                                preferred_element_type=jnp.float32)
        o_ref[...] = acc.reshape(1, H, WCt)

    return conv_kernel


def _conv_pallas(x_flat, w_big, bias_row, N, H, W, K, Cin, Ct, Hp, Wp):
    WpCin = Wp * Cin
    WCt = W * Ct
    kernel = _make_conv_kernel(H, W, K, Cin, Ct, Hp, Wp)
    return pl.pallas_call(
        kernel,
        out_shape=jax.ShapeDtypeStruct((N, H, WCt), jnp.float32),
        grid_spec=pltpu.PrefetchScalarGridSpec(
            num_scalar_prefetch=0,
            grid=(N,),
            in_specs=[
                pl.BlockSpec((1, Hp, WpCin), lambda n: (n, 0, 0)),
                # Constant blocks (index (0,0,..) every step): DMA'd once, no re-fetch.
                pl.BlockSpec((K, WpCin, WCt), lambda n: (0, 0, 0)),
                pl.BlockSpec((1, WCt), lambda n: (0, 0)),
            ],
            out_specs=pl.BlockSpec((1, H, WCt), lambda n: (n, 0, 0)),
        ),
        compiler_params=pltpu.CompilerParams(
            dimension_semantics=("parallel",)),
    )(x_flat, w_big, bias_row)


def init_upsample_ps_params(key, in_channels, out_channels, kernel_size,
                            upscaling_factor):
    """Deterministic synthetic parameters (same shapes as the torch module)."""
    Ct = out_channels * upscaling_factor ** 2
    kw_key, kb_key = jax.random.split(key)
    fan_in = in_channels * kernel_size * kernel_size
    bound = 1.0 / jnp.sqrt(fan_in)
    # torch Conv2d weight layout: (Cout_total, Cin, K, K)
    weight = jax.random.uniform(
        kw_key, (Ct, in_channels, kernel_size, kernel_size),
        dtype=jnp.float32, minval=-bound, maxval=bound)
    bias = jax.random.uniform(
        kb_key, (Ct,), dtype=jnp.float32, minval=-bound, maxval=bound)
    return weight, bias


@functools.partial(jax.jit, static_argnames=("kernel_size", "upscaling_factor"))
def upsample_ps_forward(x_nchw, weight, bias, *, kernel_size, upscaling_factor):
    """Forward pass matching Upsample_PS.forward (stride=1).

    x_nchw : (N, Cin, H, W) float32
    weight : (Cout*r^2, Cin, K, K)
    bias   : (Cout*r^2,)
    returns: (N, Cout, H*r, W*r) float32
    """
    N, Cin, H, W = x_nchw.shape
    K = kernel_size
    r = upscaling_factor
    Ct = weight.shape[0]
    Cout = Ct // (r * r)
    assert K % 2 == 1, "odd kernel_size assumed (same-size VALID conv output)"
    pad = K // 2
    assert H > pad and W > pad, "ReflectionPad2d requires spatial dims > padding"
    Hp = H + 2 * pad
    Wp = W + 2 * pad  # == W + K - 1 for odd K

    # --- glue: NCHW -> NHWC + reflection padding (ReflectionPad2d) ---
    x_nhwc = jnp.transpose(x_nchw, (0, 2, 3, 1))
    x_pad = jnp.pad(x_nhwc, ((0, 0), (pad, pad), (pad, pad), (0, 0)),
                    mode="reflect")
    # Lane-flatten (W, Cin) so in-kernel kw taps become lane-band structure in
    # the weights; cast to bf16 (f32 accumulation happens in-kernel).
    x_flat = x_pad.reshape(N, Hp, Wp * Cin).astype(jnp.bfloat16)

    # --- weights: banded (Toeplitz) slabs, one per kernel row kh ---
    # w_big[kh, wp*Cin + ci, w*Ct + ct] = w_hwio[kh, wp - w, ci, ct]
    #                                     if 0 <= wp - w < K else 0
    w_hwio = jnp.transpose(weight, (2, 3, 1, 0))  # (K, K, Cin, Ct)
    wp_idx = jnp.arange(Wp)
    w_idx = jnp.arange(W)
    kw_idx = jnp.arange(K)
    ind = (wp_idx[None, :, None]
           == (w_idx[None, None, :] + kw_idx[:, None, None])).astype(weight.dtype)
    # ind: (K, Wp, W);  w_big: (K, Wp, Cin, W, Ct)
    w_big = jnp.einsum("qpw,hqic->hpiwc", ind, w_hwio)
    w_big = w_big.reshape(K, Wp * Cin, W * Ct).astype(jnp.bfloat16)

    # Bias tiled along W so it broadcasts over the lane-dense (H, W*Ct) output.
    bias_row = jnp.tile(bias, W).reshape(1, W * Ct).astype(jnp.float32)

    # --- hot path: convolution in the Pallas kernel (lane-dense output) ---
    conv_flat = _conv_pallas(x_flat, w_big, bias_row,
                             N, H, W, K, Cin, Ct, Hp, Wp)  # (N, H, W*Ct)

    # --- glue: PixelShuffle(r).  (N,H,W*Ct) bytes == row-major (N,H,W,Ct);
    # torch maps channel c*r^2 + i*r + j to spatial offset (i, j).
    out = conv_flat.reshape(N, H, W, Cout, r, r)
    out = jnp.transpose(out, (0, 3, 1, 4, 2, 5))  # (N, Cout, H, r, W, r)
    out = out.reshape(N, Cout, H * r, W * r)
    return out


def _reference_forward(x_nchw, weight, bias, kernel_size, upscaling_factor):
    """Pure-JAX reference (lax conv) mirroring the kernel's bf16 input cast."""
    N, Cin, H, W = x_nchw.shape
    K = kernel_size
    r = upscaling_factor
    Ct = weight.shape[0]
    Cout = Ct // (r * r)
    pad = K // 2
    x_nhwc = jnp.transpose(x_nchw, (0, 2, 3, 1))
    x_pad = jnp.pad(x_nhwc, ((0, 0), (pad, pad), (pad, pad), (0, 0)),
                    mode="reflect").astype(jnp.bfloat16)
    w_hwio = jnp.transpose(weight, (2, 3, 1, 0)).astype(jnp.bfloat16)
    conv = jax.lax.conv_general_dilated(
        x_pad, w_hwio, window_strides=(1, 1), padding="VALID",
        dimension_numbers=("NHWC", "HWIO", "NHWC"),
        preferred_element_type=jnp.float32) + bias
    out = conv.reshape(N, H, W, Cout, r, r)
    out = jnp.transpose(out, (0, 3, 1, 4, 2, 5)).reshape(N, Cout, H * r, W * r)
    return out


if __name__ == "__main__":
    # Small shapes consistent with the module.
    N, Cin, H, W = 2, 4, 16, 16
    Cout, K, r = 4, 3, 2

    key = jax.random.PRNGKey(0)
    x_key, p_key = jax.random.split(key)
    x = jax.random.normal(x_key, (N, Cin, H, W), dtype=jnp.float32)
    weight, bias = init_upsample_ps_params(p_key, Cin, Cout, K, r)

    out = upsample_ps_forward(x, weight, bias,
                              kernel_size=K, upscaling_factor=r)
    out = jax.block_until_ready(out)

    assert out.shape == (N, Cout, H * r, W * r), out.shape

    ref = jax.block_until_ready(_reference_forward(x, weight, bias, K, r))
    assert jnp.allclose(out, ref, atol=2e-2, rtol=2e-2), \
        float(jnp.max(jnp.abs(out - ref)))

    print("KERNEL_OK")
</pallas_src>

<mosaic_0001>
module attributes {stable_mosaic.version = 11 : i64} {
  func.func @conv_kernel(%arg0: i32, %arg1: memref<1x18x72xbf16, #tpu.memory_space<vmem>>, %arg2: memref<3x72x256xbf16, #tpu.memory_space<vmem>>, %arg3: memref<1x256xf32, #tpu.memory_space<vmem>>, %arg4: memref<1x16x256xf32, #tpu.memory_space<vmem>>) attributes {dimension_semantics = [#tpu.dimension_semantics<parallel>], iteration_bounds = array<i64: 2>, scalar_prefetch = 0 : i64, scratch_operands = 0 : i64, tpu.core_type = #tpu.core_type<tc>, window_params = [{transform_indices = @transform_0, window_bounds = array<i64: 1, 18, 72>}, {pipeline_mode = #tpu.pipeline_mode<synchronous>, transform_indices = @transform_1, window_bounds = array<i64: 3, 72, 256>}, {pipeline_mode = #tpu.pipeline_mode<synchronous>, transform_indices = @transform_2, window_bounds = array<i64: 1, 256>}, {transform_indices = @transform_3, window_bounds = array<i64: 1, 16, 256>}]} {
    %c0 = arith.constant 0 : index
    %c0_0 = arith.constant 0 : index
    %0 = vector.load %arg3[%c0, %c0_0] : memref<1x256xf32, #tpu.memory_space<vmem>>, vector<1x256xf32>
    %1 = vector.shape_cast %0 : vector<1x256xf32> to vector<1x256xf32>
    %2 = vector.broadcast %1 : vector<1x256xf32> to vector<16x256xf32>
    %c0_1 = arith.constant 0 : index
    %c0_2 = arith.constant 0 : index
    %c0_3 = arith.constant 0 : index
    %3 = vector.load %arg1[%c0_1, %c0_2, %c0_3] : memref<1x18x72xbf16, #tpu.memory_space<vmem>>, vector<1x16x72xbf16>
    %4 = vector.shape_cast %3 : vector<1x16x72xbf16> to vector<16x72xbf16>
    %c0_4 = arith.constant 0 : index
    %c0_5 = arith.constant 0 : index
    %c0_6 = arith.constant 0 : index
    %5 = vector.load %arg2[%c0_4, %c0_5, %c0_6] : memref<3x72x256xbf16, #tpu.memory_space<vmem>>, vector<1x72x256xbf16>
    %6 = vector.shape_cast %5 : vector<1x72x256xbf16> to vector<72x256xbf16>
    %cst = arith.constant dense<0.000000e+00> : vector<16x256xf32>
    %7 = tpu.matmul %4, %6, %cst {dimension_numbers = #tpu.dot_dimension_numbers<[1], [0], [0], [1], [0, 0, 1, 1], [], []>} : vector<16x72xbf16>, vector<72x256xbf16>, vector<16x256xf32> -> vector<16x256xf32>
    %8 = arith.addf %2, %7 : vector<16x256xf32>
    %c0_7 = arith.constant 0 : index
    %c1 = arith.constant 1 : index
    %c0_8 = arith.constant 0 : index
    %9 = vector.load %arg1[%c0_7, %c1, %c0_8] : memref<1x18x72xbf16, #tpu.memory_space<vmem>>, vector<1x16x72xbf16>
    %10 = vector.shape_cast %9 : vector<1x16x72xbf16> to vector<16x72xbf16>
    %c1_9 = arith.constant 1 : index
    %c0_10 = arith.constant 0 : index
    %c0_11 = arith.constant 0 : index
    %11 = vector.load %arg2[%c1_9, %c0_10, %c0_11] : memref<3x72x256xbf16, #tpu.memory_space<vmem>>, vector<1x72x256xbf16>
    %12 = vector.shape_cast %11 : vector<1x72x256xbf16> to vector<72x256xbf16>
    %cst_12 = arith.constant dense<0.000000e+00> : vector<16x256xf32>
    %13 = tpu.matmul %10, %12, %cst_12 {dimension_numbers = #tpu.dot_dimension_numbers<[1], [0], [0], [1], [0, 0, 1, 1], [], []>} : vector<16x72xbf16>, vector<72x256xbf16>, vector<16x256xf32> -> vector<16x256xf32>
    %14 = arith.addf %8, %13 : vector<16x256xf32>
    %c0_13 = arith.constant 0 : index
    %c2 = arith.constant 2 : index
    %c0_14 = arith.constant 0 : index
    %15 = vector.load %arg1[%c0_13, %c2, %c0_14] : memref<1x18x72xbf16, #tpu.memory_space<vmem>>, vector<1x16x72xbf16>
    %16 = vector.shape_cast %15 : vector<1x16x72xbf16> to vector<16x72xbf16>
    %c2_15 = arith.constant 2 : index
    %c0_16 = arith.constant 0 : index
    %c0_17 = arith.constant 0 : index
    %17 = vector.load %arg2[%c2_15, %c0_16, %c0_17] : memref<3x72x256xbf16, #tpu.memory_space<vmem>>, vector<1x72x256xbf16>
    %18 = vector.shape_cast %17 : vector<1x72x256xbf16> to vector<72x256xbf16>
    %cst_18 = arith.constant dense<0.000000e+00> : vector<16x256xf32>
    %19 = tpu.matmul %16, %18, %cst_18 {dimension_numbers = #tpu.dot_dimension_numbers<[1], [0], [0], [1], [0, 0, 1, 1], [], []>} : vector<16x72xbf16>, vector<72x256xbf16>, vector<16x256xf32> -> vector<16x256xf32>
    %20 = arith.addf %14, %19 : vector<16x256xf32>
    %21 = vector.shape_cast %20 : vector<16x256xf32> to vector<1x16x256xf32>
    %c0_19 = arith.constant 0 : index
    %c0_20 = arith.constant 0 : index
    %c0_21 = arith.constant 0 : index
    %22 = vector.load %arg4[%c0_19, %c0_20, %c0_21] : memref<1x16x256xf32, #tpu.memory_space<vmem>>, vector<1x16x256xf32>
    tpu.vector_store %arg4[%c0_19, %c0_20, %c0_21], %21 {strides = array<i32>} : memref<1x16x256xf32, #tpu.memory_space<vmem>>, vector<1x16x256xf32>,
    return
  }
  func.func @transform_0(%arg0: i32) -> (i32, i32, i32) {
    %c0_i32 = arith.constant 0 : i32
    %c0_i32_0 = arith.constant 0 : i32
    %c0_i32_1 = arith.constant 0 : i32
    return %arg0, %c0_i32, %c0_i32_0 : i32, i32, i32
  }
  func.func @transform_1(%arg0: i32) -> (i32, i32, i32) {
    %c0_i32 = arith.constant 0 : i32
    %c0_i32_0 = arith.constant 0 : i32
    %c0_i32_1 = arith.constant 0 : i32
    %c0_i32_2 = arith.constant 0 : i32
    return %c0_i32, %c0_i32_0, %c0_i32_1 : i32, i32, i32
  }
  func.func @transform_2(%arg0: i32) -> (i32, i32) {
    %c0_i32 = arith.constant 0 : i32
    %c0_i32_0 = arith.constant 0 : i32
    %c0_i32_1 = arith.constant 0 : i32
    return %c0_i32, %c0_i32_0 : i32, i32
  }
  func.func @transform_3(%arg0: i32) -> (i32, i32, i32) {
    %c0_i32 = arith.constant 0 : i32
    %c0_i32_0 = arith.constant 0 : i32
    %c0_i32_1 = arith.constant 0 : i32
    return %arg0, %c0_i32, %c0_i32_0 : i32, i32, i32
  }
}

</mosaic_0001>

<llo_original>
// kernel: tile.8
$region0: #{tile.8}
  #allocation0 [shape = 's32[1]{0}', space=sflag, size = 0x4, scoped, tag = 'scoped memory for tile.8']
  %s0 = inlined_call_operand.vmem [shape: f32[16], index: 0, kind: input, shape index: {}]
  %s1 = inlined_call_operand.vmem [shape: f32[16,16], index: 1, kind: output, shape index: {}]
  // Predicated region
  $region2: #{tile.8} parent=0 // pred_check
    _
  $region3: #{tile.8} parent=0 // pred_check_branch
    %3 = sbr.rel (0) target = $region5
  $region4: #{tile.8} parent=0 // pred_region
    _
  $region5: #{tile.8} parent=0 // pred_fallthru
    _
  %v4 = vld [vmem:[%s0] ss:$0 sm:$0xff]
  %5 = vst [vmem:[%s1] sm:$0xff] %v4
  %s6 = scalar_lea.vmem %s1, 8
  %7 = vst [vmem:[%s6] sm:$0xff] %v4

// kernel: tile.9
$region0: #{tile.9}
  %s0 = inlined_call_operand.vmem [shape: f32[16,16], index: 0, kind: input, shape index: {}]
  %s1 = inlined_call_operand.vmem [shape: f32[1,256], index: 1, kind: output, shape index: {}]
  $region1: #{tile.9} parent=0
    #allocation0 [shape = 'u8[8192]{0}', space=vmem, size = 0x2000, scoped, tag = 'scoped mem for output reshape']
    %s2 = smov 3
    %v3 = vld [vmem:[%s0] ss:$8 sm:%s2]
    %vm4 = vcmask 130048
    %5 = vst.msk [vmem:[#allocation0] ss:$8 sm:$0x3] %vm4, %v3
    %s6 = scalar_lea.vmem %s0, 7
    %s7 = smov 3
    %v8 = vld [vmem:[%s6] ss:$8 sm:%s7]
    %9 = vrot.lane.b32.xlu0 %v8, 112
    %v10 = vpop.permute.xlu0 %9
    %vm11 = vcmask 1048448
    %12 = vst.msk [vmem:[#allocation0] ss:$8 sm:$0x3] %vm11, %v10
    %s13 = scalar_lea.vmem %s0, 6
    %s14 = smov 3
    %v15 = vld [vmem:[%s13] ss:$8 sm:%s14]
    %16 = vrot.lane.b32.xlu0 %v15, 96
    %v17 = vpop.permute.xlu0 %16
    %vm18 = vcmask 917248
    %19 = vst.msk [vmem:[#allocation0] ss:$8 sm:$0x3] %vm18, %v17
    %s20 = scalar_lea.vmem %s0, 5
    %s21 = smov 3
    %v22 = vld [vmem:[%s20] ss:$8 sm:%s21]
    %23 = vrot.lane.b32.xlu0 %v22, 80
    %v24 = vpop.permute.xlu0 %23
    %vm25 = vcmask 786048
    %26 = vst.msk [vmem:[#allocation0] ss:$8 sm:$0x3] %vm25, %v24
    %s27 = scalar_lea.vmem %s0, 4
    %s28 = smov 3
    %v29 = vld [vmem:[%s27] ss:$8 sm:%s28]
    %30 = vrot.lane.b32.xlu0 %v29, 64
    %v31 = vpop.permute.xlu0 %30
    %vm32 = vcmask 654848
    %33 = vst.msk [vmem:[#allocation0] ss:$8 sm:$0x3] %vm32, %v31
    %s34 = scalar_lea.vmem %s0, 3
    %s35 = smov 3
    %v36 = vld [vmem:[%s34] ss:$8 sm:%s35]
    %37 = vrot.lane.b32.xlu0 %v36, 48
    %v38 = vpop.permute.xlu0 %37
    %vm39 = vcmask 523648
    %40 = vst.msk [vmem:[#allocation0] ss:$8 sm:$0x3] %vm39, %v38
    %s41 = scalar_lea.vmem %s0, 2
    %s42 = smov 3
    %v43 = vld [vmem:[%s41] ss:$8 sm:%s42]
    %44 = vrot.lane.b32.xlu0 %v43, 32
    %v45 = vpop.permute.xlu0 %44
    %vm46 = vcmask 392448
    %47 = vst.msk [vmem:[#allocation0] ss:$8 sm:$0x3] %vm46, %v45
    %s48 = scalar_lea.vmem %s0, 1
    %s49 = smov 3
    %v50 = vld [vmem:[%s48] ss:$8 sm:%s49]
    %51 = vrot.lane.b32.xlu0 %v50, 16
    %v52 = vpop.permute.xlu0 %51
    %vm53 = vcmask 261248
    %54 = vst.msk [vmem:[#allocation0] ss:$8 sm:$0x3] %vm53, %v52
    %s56 = sshllo.u32 0, 1
    %v58 = vld [vmem:[#allocation0] sm:%s56]
    %s59 = sshllo.u32 0, 1
    %60 = vst [vmem:[%s1] sm:%s59] %v58
    %s61 = scalar_lea.vmem [#allocation0], 8
    %v62 = vld [vmem:[%s61] sm:%s56]
    %s63 = sshllo.u32 0, 1
    %s64 = scalar_lea.vmem %s1, 1
    %65 = vst [vmem:[%s64] sm:%s63] %v62

// kernel: upsample_ps_forward.1
$region0: #{upsample_ps_forward.1}
  #allocation0 [shape = 'u32[]', space=smem, size = 0x4, offset = 0x4, fixed_abs, tag = 'smem constant byte address 0x4 - core index']
  #allocation1 [shape = 'u32[144,128]{1,0:T(1,128)}', space=vmem, size = 0x12000, scoped, tag = 'internal scratch']
  %s0 = inlined_call_operand.vmem [shape: bf16[2,18,72], index: 0, kind: input, shape index: {}]
  %s1 = inlined_call_operand.vmem [shape: bf16[3,72,256], index: 1, kind: input, shape index: {}]
  %s2 = inlined_call_operand.vmem [shape: f32[1,256], index: 2, kind: input, shape index: {}]
  %s3 = inlined_call_operand.vmem [shape: f32[2,16,256], index: 3, kind: output, shape index: {}]
  %s4 = sld [smem:[#allocation0]]
  $region45: #{upsample_ps_forward.1} parent=0
    _
  %s6 = ssub.s32 1, %s4
  %s7 = scalar_select 0, %s6, %s4
  loop: start=0, step=1, limit=4
  $region2: #{upsample_ps_forward.1} parent=0 // loop_pre_header
    _
  $region3: #{upsample_ps_forward.1} parent=0 // loop_header
    %s9 = sphi 0, %s13
    %p10 = scmp.ge.s32.totalorder %s9, 4
    %s19 = sphi 0, %s21
    %s22 = sphi 0, %s19
    %s23 = sphi 0, %s22
    %s39 = sphi 0, %s23
    %s43 = sphi 0, %s43
    %s45 = sphi 0, %s43
    %s46 = sphi 0, %s45
    %s60 = sphi 0, %s46
    %s64 = sphi 0, %s64
    %s66 = sphi 0, %s64
    %s67 = sphi 0, %s66
    %s81 = sphi 0, %s67
    %s87 = sphi 0, %s89
    %s90 = sphi 0, %s87
    %s91 = sphi 0, %s90
    %s107 = sphi 0, %s91
  $region4: #{upsample_ps_forward.1} parent=0 // loop_header_branch
    %12 = sbr.rel (%p10) target = $region8
  $region5: #{upsample_ps_forward.1} parent=0 // loop_body
    %s14 = ssub.s32 %s9, 1
    %s15 = ssub.s32 %s9, 2
    %s16 = sadd.s32 %s9, 1
    %s17 = ssub.s32 %s9, %s16
    %p18 = scmp.eq.s32.totalorder %s17, 0
    %s20 = sadd.s32 %s19, 1
    %s21 = scalar_select %p18, %s19, %s20
    %p24 = pneg %p18
    %p25 = scmp.eq.s32.totalorder %s9, 1
    %p26 = por %p24, %p25
    %p27 = scmp.ne.s32.totalorder %s19, %s22
    %p28 = scmp.eq.s32.totalorder %s9, 0
    %p29 = por %p27, %p28
    %p30 = scmp.ne.s32.totalorder %s19, %s22
    %p31 = scmp.eq.s32.totalorder %s14, 1
    %p32 = por %p30, %p31
    %p33 = scmp.ne.s32.totalorder %s22, %s23
    %p34 = scmp.eq.s32.totalorder %s14, 0
    %p35 = por %p33, %p34
    %p36 = scmp.ne.s32.totalorder %s22, %s23
    %p37 = scmp.eq.s32.totalorder %s15, 1
    %p38 = por %p36, %p37
    %p40 = scmp.ne.s32.totalorder %s23, %s39
    %p41 = scmp.eq.s32.totalorder %s15, 0
    %p42 = por %p40, %p41
    %s44 = sadd.s32 %s43, 1
    %p47 = scmp.eq.s32.totalorder %s9, 1
    %p48 = scmp.ne.s32.totalorder %s43, %s45
    %p49 = scmp.eq.s32.totalorder %s9, 0
    %p50 = por %p48, %p49
    %p51 = scmp.ne.s32.totalorder %s43, %s45
    %p52 = scmp.eq.s32.totalorder %s14, 1
    %p53 = por %p51, %p52
    %p54 = scmp.ne.s32.totalorder %s45, %s46
    %p55 = scmp.eq.s32.totalorder %s14, 0
    %p56 = por %p54, %p55
    %p57 = scmp.ne.s32.totalorder %s45, %s46
    %p58 = scmp.eq.s32.totalorder %s15, 1
    %p59 = por %p57, %p58
    %p61 = scmp.ne.s32.totalorder %s46, %s60
    %p62 = scmp.eq.s32.totalorder %s15, 0
    %p63 = por %p61, %p62
    %s65 = sadd.s32 %s64, 1
    %p68 = scmp.eq.s32.totalorder %s9, 1
    %p69 = scmp.ne.s32.totalorder %s64, %s66
    %p70 = scmp.eq.s32.totalorder %s9, 0
    %p71 = por %p69, %p70
    %p72 = scmp.ne.s32.totalorder %s64, %s66
    %p73 = scmp.eq.s32.totalorder %s14, 1
    %p74 = por %p72, %p73
    %p75 = scmp.ne.s32.totalorder %s66, %s67
    %p76 = scmp.eq.s32.totalorder %s14, 0
    %p77 = por %p75, %p76
    %p78 = scmp.ne.s32.totalorder %s66, %s67
    %p79 = scmp.eq.s32.totalorder %s15, 1
    %p80 = por %p78, %p79
    %p82 = scmp.ne.s32.totalorder %s67, %s81
    %p83 = scmp.eq.s32.totalorder %s15, 0
    %p84 = por %p82, %p83
    %s85 = ssub.s32 %s9, %s16
    %p86 = scmp.eq.s32.totalorder %s85, 0
    %s88 = sadd.s32 %s87, 1
    %s89 = scalar_select %p86, %s87, %s88
    %p92 = pneg %p86
    %p93 = scmp.eq.s32.totalorder %s9, 1
    %p94 = por %p92, %p93
    %p95 = scmp.ne.s32.totalorder %s87, %s90
    %p96 = scmp.eq.s32.totalorder %s9, 0
    %p97 = por %p95, %p96
    %p98 = scmp.ne.s32.totalorder %s87, %s90
    %p99 = scmp.eq.s32.totalorder %s14, 1
    %p100 = por %p98, %p99
    %p101 = scmp.ne.s32.totalorder %s90, %s91
    %p102 = scmp.eq.s32.totalorder %s14, 0
    %p103 = por %p101, %p102
    %p104 = scmp.ne.s32.totalorder %s90, %s91
    %p105 = scmp.eq.s32.totalorder %s15, 1
    %p106 = por %p104, %p105
    %p108 = scmp.ne.s32.totalorder %s91, %s107
    %p109 = scmp.eq.s32.totalorder %s15, 0
    %p110 = por %p108, %p109
    %p111 = scmp.le.s32.totalorder 1, %s9
    %p112 = scmp.lt.s32.totalorder %s9, 3
    %p113 = pnand %p111, %p112
    %p114 = pneg %p113
    // Predicated region
    $region9: #{upsample_ps_forward.1} parent=5 // pred_check
      _
    $region10: #{upsample_ps_forward.1} parent=5 // pred_check_branch
      %116 = sbr.rel (%p113) target = $region12
    $region11: #{upsample_ps_forward.1} parent=5 // pred_region
      %s117 = ssub.s32 %s9, 1
      // Predicated region
      $region13: #{upsample_ps_forward.1} parent=11 // pred_check
        %p118 = pneg %p56
      $region14: #{upsample_ps_forward.1} parent=11 // pred_check_branch
        %120 = sbr.rel (%p118) target = $region16
      $region15: #{upsample_ps_forward.1} parent=11 // pred_region
        _
      $region16: #{upsample_ps_forward.1} parent=11 // pred_fallthru
        _
      // Predicated region
      $region17: #{upsample_ps_forward.1} parent=11 // pred_check
        %p121 = pneg %p77
      $region18: #{upsample_ps_forward.1} parent=11 // pred_check_branch
        %123 = sbr.rel (%p121) target = $region20
      $region19: #{upsample_ps_forward.1} parent=11 // pred_region
        _
      $region20: #{upsample_ps_forward.1} parent=11 // pred_fallthru
        _
    $region12: #{upsample_ps_forward.1} parent=5 // pred_fallthru
      _
    %p124 = scmp.lt.s32.totalorder %s9, 2
    // Predicated region
    $region21: #{upsample_ps_forward.1} parent=5 // pred_check
      %p125 = pneg %p124
    $region22: #{upsample_ps_forward.1} parent=5 // pred_check_branch
      %127 = sbr.rel (%p125) target = $region24
    $region23: #{upsample_ps_forward.1} parent=5 // pred_region
      // Predicated region
      $region25: #{upsample_ps_forward.1} parent=23 // pred_check
        %p128 = pneg %p29
      $region26: #{upsample_ps_forward.1} parent=23 // pred_check_branch
        %130 = sbr.rel (%p128) target = $region28
      $region27: #{upsample_ps_forward.1} parent=23 // pred_region
        %p131 = scmp.lt.s32.totalorder %s9, 1
        %s132 = scalar_select %p131, %s9, 1
        %s133 = smul.addr %s132, 3
        %s134 = smul.addr %s133, 4
        %s135 = scalar_lea.vmem %s0, %s134
      $region28: #{upsample_ps_forward.1} parent=23 // pred_fallthru
        _
    $region24: #{upsample_ps_forward.1} parent=5 // pred_fallthru
      _
    %p136 = scmp.le.s32.totalorder 1, %s9
    %p137 = scmp.lt.s32.totalorder %s9, 3
    %p138 = pnand %p136, %p137
    %p139 = pneg %p138
    // Predicated region
    $region29: #{upsample_ps_forward.1} parent=5 // pred_check
      _
    $region30: #{upsample_ps_forward.1} parent=5 // pred_check_branch
      %141 = sbr.rel (%p138) target = $region32
    $region31: #{upsample_ps_forward.1} parent=5 // pred_region
      %s142 = ssub.s32 %s9, 1
      %p143 = scmp.lt.s32.totalorder %s14, 1
      %s144 = scalar_select %p143, %s14, 1
      %s145 = smul.addr %s144, 3
      %s146 = smul.addr %s145, 4
      %s147 = scalar_lea.vmem %s0, %s146
      %p148 = pneg %p35
      %p149 = pneg %p32
      %p150 = pneg %p56
      %p151 = pneg %p53
      %p152 = pneg %p77
      %p153 = pneg %p74
      %p154 = pneg %p103
      %p155 = pneg %p100
      %p156 = scmp.lt.s32.totalorder %s14, 1
      %s157 = scalar_select %p156, %s14, 1
      %s158 = smul.addr %s157, 4
      %s159 = smul.addr %s158, 8
      %s160 = scalar_lea.vmem %s3, %s159
      %p161 = scmp.lt.s32.totalorder %s14, 1
      %s162 = scalar_select %p161, %s14, 1
      %s163 = smul.addr %s162, 3
      %s164 = smul.addr %s163, 4
      %s165 = scalar_lea.vmem %s0, %s164
      %p166 = scmp.lt.s32.totalorder %s14, 1
      %s167 = scalar_select %p166, %s14, 1
      %s168 = smul.addr %s167, 4
      %s169 = smul.addr %s168, 8
      %s170 = scalar_lea.vmem %s3, %s169
      %v172 = vld [vmem:[%s2] sm:$0x3]
      %v174 = vlaneseq
      %v175 = vshrl.u32 %v174, 7
      %v176 = vsub.s32 0, %v175
      %v177 = vrot.slane %v172, %v176
      %v178 = vlaneseq
      %v179 = vshrl.u32 %v178, 7
      %v180 = vsub.s32 1, %v179
      %v181 = vrot.slane %v172, %v180
      %v184 = vld [vmem:[%s165] sm:$0xf]
      %v185 = vld [vmem:[%s165 + $0x4] sm:$0xf]
      %v186 = vld [vmem:[%s1] sm:$0xff]
      %v187 = vld [vmem:[%s1 + $0x8] sm:$0xff]
      %v188 = vld [vmem:[%s1 + $0x10] sm:$0xff]
      %v189 = vld [vmem:[%s1 + $0x18] sm:$0xff]
      %v190 = vld [vmem:[%s1 + $0x20] sm:$0xff]
      %v191 = vld [vmem:[%s1 + $0x28] sm:$0xff]
      %v192 = vld [vmem:[%s1 + $0x30] sm:$0xff]
      %v193 = vld [vmem:[%s1 + $0x38] sm:$0xff]
      %v194 = vld [vmem:[%s1 + $0x40] sm:$0xff]
      %v197 = vunpack.c.l.b16 %v184
      %v198 = vunpack.c.l.b16 %v185
      %v199 = vpack.c.b16 %v198, %v197
      %v209 = vunpack.c.l.b16 %v186
      %v210 = vunpack.c.h.b16 %v186
      %v211 = vunpack.c.l.b16 %v187
      %v212 = vunpack.c.h.b16 %v187
      %v213 = vunpack.c.l.b16 %v188
      %v214 = vunpack.c.h.b16 %v188
      %v215 = vunpack.c.l.b16 %v189
      %v216 = vunpack.c.h.b16 %v189
      %v217 = vunpack.c.l.b16 %v190
      %v218 = vunpack.c.h.b16 %v190
      %v219 = vunpack.c.l.b16 %v191
      %v220 = vunpack.c.h.b16 %v191
      %v221 = vunpack.c.l.b16 %v192
      %v222 = vunpack.c.h.b16 %v192
      %v223 = vunpack.c.l.b16 %v193
      %v224 = vunpack.c.h.b16 %v193
      %v225 = vunpack.c.l.b16 %v194
      %v226 = vunpack.c.h.b16 %v194
      %v227 = vpack.c.b16 %v211, %v209
      %v228 = vpack.c.b16 %v212, %v210
      %v229 = vpack.c.b16 %v215, %v213
      %v230 = vpack.c.b16 %v216, %v214
      %v231 = vpack.c.b16 %v219, %v217
      %v232 = vpack.c.b16 %v220, %v218
      %v233 = vpack.c.b16 %v223, %v221
      %v234 = vpack.c.b16 %v224, %v222
      %v235 = vpack.c.b16 %v225, %v225
      %v236 = vpack.c.b16 %v226, %v226
      %vm245 = vcmask 588800
      %v247 = vsel %vm245, %v199, 0
      %vm249 = vcmask 1043456
      %v251 = vsel %vm249, %v235, 0
      %v254 = vsel %vm249, %v236, 0
      %256 = vmatprep.subr.bf16.mxu0 %v228
      %257 = vmatpush1.bf16.msra.mxu0 %v227
      %258 = vmatprep.subr.bf16.mxu0 %v230
      %259 = vmatpush1.bf16.msra.mxu0 %v229
      %260 = vmatprep.subr.bf16.mxu0 %v232
      %261 = vmatpush1.bf16.msra.mxu0 %v231
      %262 = vmatprep.subr.bf16.mxu0 %v234
      %263 = vmatpush1.bf16.msra.mxu0 %v233
      %264 = vmatprep.subr.bf16.mxu0 %v254
      %265 = vmatpush1.bf16.msra.mxu0 %v251
      %266 = vmatprep.subr.bf16.mxu0 0
      %267 = vmatpush1.bf16.msra.mxu0 0
      %268 = vmatprep.subr.bf16.mxu0 0
      %269 = vmatpush1.bf16.msra.mxu0 0
      %270 = vmatprep.subr.bf16.mxu0 0
      %271 = vmatpush1.bf16.msra.mxu0 0
      %272 = vmatprep.subr.bf16.mxu0 0
      %273 = vmatpush1.bf16.msra.mxu0 0
      %274 = vmatprep.subr.bf16.mxu0 0
      %275 = vmatpush1.bf16.msra.mxu0 0
      %276 = vmatprep.subr.bf16.mxu0 0
      %277 = vmatpush1.bf16.msra.mxu0 0
      %278 = vmatprep.subr.bf16.mxu0 0
      %279 = vmatpush1.bf16.msra.mxu0 0
      %280 = vmatprep.subr.bf16.mxu0 0
      %281 = vmatpush1.bf16.msra.mxu0 0
      %282 = vmatprep.subr.bf16.mxu0 0
      %283 = vmatpush1.bf16.msra.mxu0 0
      %284 = vmatprep.subr.bf16.mxu0 0
      %285 = vmatpush1.bf16.msra.mxu0 0
      %286 = vmatprep.subr.bf16.mxu0 0
      %287 = vmatpush1.bf16.msra.mxu0 0
      %288 = vmatprep.mubr.bf16.mxu0 0
      %289 = vmatmul.mubr.bf16.gmra.mrb[0].mxu0 %v247
      %v290 = vpop.f32.mrb[0].mxu0
      %v291 = vadd.f32 0.0, %v290
      %v292 = vpop.f32.mrb[0].mxu0
      %v293 = vadd.f32 0.0, %v292
      %v294 = vpop.f32.mrb[0].mxu0
      %v295 = vadd.f32 0.0, %v294
      %v296 = vpop.f32.mrb[0].mxu0
      %v297 = vadd.f32 0.0, %v296
      %298 = vdwg.mxu0
      %v299 = vadd.f32 %v177, %v291
      %v300 = vadd.f32 %v181, %v293
      %v301 = vadd.f32 %v177, %v295
      %v302 = vadd.f32 %v181, %v297
      %v303 = vld [vmem:[%s165] sm:$0xf]
      %v304 = vld [vmem:[%s165 + $0x4] sm:$0xf]
      %v305 = vld [vmem:[%s165 + $0x8] sm:$0x1]
      %s306 = scalar_lea.vmem %s1, 72
      %v307 = vld [vmem:[%s306] sm:$0xff]
      %v308 = vld [vmem:[%s306 + $0x8] sm:$0xff]
      %v309 = vld [vmem:[%s306 + $0x10] sm:$0xff]
      %v310 = vld [vmem:[%s306 + $0x18] sm:$0xff]
      %v311 = vld [vmem:[%s306 + $0x20] sm:$0xff]
      %v312 = vld [vmem:[%s306 + $0x28] sm:$0xff]
      %v313 = vld [vmem:[%s306 + $0x30] sm:$0xff]
      %v314 = vld [vmem:[%s306 + $0x38] sm:$0xff]
      %v315 = vld [vmem:[%s306 + $0x40] sm:$0xff]
      %v319 = vunpack.c.l.b16 %v303
      %v320 = vunpack.c.l.b16 %v304
      %v321 = vunpack.c.l.b16 %v305
      %v322 = vpack.c.b16 %v320, %v319
      %v323 = vpack.c.b16 %v321, %v321
      %vm324 = vsmask.f32 7424
      %v326 = vshrl.u32 %v322, 16
      %v328 = vshll.u32 %v322, 16
      %v330 = vrot.slane %v328, 1
      %v331 = vor.u32 %v326, %v330
      %v333 = vshll.u32 %v323, 16
      %v335 = vrot.slane %v333, 1
      %v336 = vsel %vm324, %v331, %v335
      %v346 = vunpack.c.l.b16 %v307
      %v347 = vunpack.c.h.b16 %v307
      %v348 = vunpack.c.l.b16 %v308
      %v349 = vunpack.c.h.b16 %v308
      %v350 = vunpack.c.l.b16 %v309
      %v351 = vunpack.c.h.b16 %v309
      %v352 = vunpack.c.l.b16 %v310
      %v353 = vunpack.c.h.b16 %v310
      %v354 = vunpack.c.l.b16 %v311
      %v355 = vunpack.c.h.b16 %v311
      %v356 = vunpack.c.l.b16 %v312
      %v357 = vunpack.c.h.b16 %v312
      %v358 = vunpack.c.l.b16 %v313
      %v359 = vunpack.c.h.b16 %v313
      %v360 = vunpack.c.l.b16 %v314
      %v361 = vunpack.c.h.b16 %v314
      %v362 = vunpack.c.l.b16 %v315
      %v363 = vunpack.c.h.b16 %v315
      %v364 = vpack.c.b16 %v348, %v346
      %v365 = vpack.c.b16 %v349, %v347
      %v366 = vpack.c.b16 %v352, %v350
      %v367 = vpack.c.b16 %v353, %v351
      %v368 = vpack.c.b16 %v356, %v354
      %v369 = vpack.c.b16 %v357, %v355
      %v370 = vpack.c.b16 %v360, %v358
      %v371 = vpack.c.b16 %v361, %v359
      %v372 = vpack.c.b16 %v362, %v362
      %v373 = vpack.c.b16 %v363, %v363
      %v383 = vsel %vm245, %v336, 0
      %v386 = vsel %vm249, %v372, 0
      %v389 = vsel %vm249, %v373, 0
      %391 = vmatprep.subr.bf16.mxu0 %v365
      %392 = vmatpush1.bf16.msra.mxu0 %v364
      %393 = vmatprep.subr.bf16.mxu0 %v367
      %394 = vmatpush1.bf16.msra.mxu0 %v366
      %395 = vmatprep.subr.bf16.mxu0 %v369
      %396 = vmatpush1.bf16.msra.mxu0 %v368
      %397 = vmatprep.subr.bf16.mxu0 %v371
      %398 = vmatpush1.bf16.msra.mxu0 %v370
      %399 = vmatprep.subr.bf16.mxu0 %v389
      %400 = vmatpush1.bf16.msra.mxu0 %v386
      %401 = vmatprep.subr.bf16.mxu0 0
      %402 = vmatpush1.bf16.msra.mxu0 0
      %403 = vmatprep.subr.bf16.mxu0 0
      %404 = vmatpush1.bf16.msra.mxu0 0
      %405 = vmatprep.subr.bf16.mxu0 0
      %406 = vmatpush1.bf16.msra.mxu0 0
      %407 = vmatprep.subr.bf16.mxu0 0
      %408 = vmatpush1.bf16.msra.mxu0 0
      %409 = vmatprep.subr.bf16.mxu0 0
      %410 = vmatpush1.bf16.msra.mxu0 0
      %411 = vmatprep.subr.bf16.mxu0 0
      %412 = vmatpush1.bf16.msra.mxu0 0
      %413 = vmatprep.subr.bf16.mxu0 0
      %414 = vmatpush1.bf16.msra.mxu0 0
      %415 = vmatprep.subr.bf16.mxu0 0
      %416 = vmatpush1.bf16.msra.mxu0 0
      %417 = vmatprep.subr.bf16.mxu0 0
      %418 = vmatpush1.bf16.msra.mxu0 0
      %419 = vmatprep.subr.bf16.mxu0 0
      %420 = vmatpush1.bf16.msra.mxu0 0
      %421 = vmatprep.subr.bf16.mxu0 0
      %422 = vmatpush1.bf16.msra.mxu0 0
      %423 = vmatprep.mubr.bf16.mxu0 0
      %424 = vmatmul.mubr.bf16.gmra.mrb[0].mxu0 %v383
      %v425 = vpop.f32.mrb[0].mxu0
      %v426 = vadd.f32 0.0, %v425
      %v427 = vpop.f32.mrb[0].mxu0
      %v428 = vadd.f32 0.0, %v427
      %v429 = vpop.f32.mrb[0].mxu0
      %v430 = vadd.f32 0.0, %v429
      %v431 = vpop.f32.mrb[0].mxu0
      %v432 = vadd.f32 0.0, %v431
      %433 = vdwg.mxu0
      %v434 = vadd.f32 %v299, %v426
      %v435 = vadd.f32 %v300, %v428
      %v436 = vadd.f32 %v301, %v430
      %v437 = vadd.f32 %v302, %v432
      %v438 = vld [vmem:[%s165] sm:$0xe]
      %s439 = scalar_lea.vmem %s1, 144
      %v440 = vld [vmem:[%s439] sm:$0xff]
      %v441 = vld [vmem:[%s439 + $0x8] sm:$0xff]
      %v442 = vld [vmem:[%s439 + $0x10] sm:$0xff]
      %v443 = vld [vmem:[%s439 + $0x18] sm:$0xff]
      %v444 = vld [vmem:[%s439 + $0x20] sm:$0xff]
      %v445 = vld [vmem:[%s439 + $0x28] sm:$0xff]
      %v446 = vld [vmem:[%s439 + $0x30] sm:$0xff]
      %v447 = vld [vmem:[%s439 + $0x38] sm:$0xff]
      %v448 = vld [vmem:[%s439 + $0x40] sm:$0xff]
      %v450 = vunpack.c.l.b16 %v438
      %v451 = vpack.c.b16 %v320, %v450
      %vm452 = vcmask 1046528
      %v453 = vrot.slane %v451, 1
      %v454 = vrot.slane %v323, 1
      %v455 = vsel %vm452, %v453, %v454
      %v465 = vunpack.c.l.b16 %v440
      %v466 = vunpack.c.h.b16 %v440
      %v467 = vunpack.c.l.b16 %v441
      %v468 = vunpack.c.h.b16 %v441
      %v469 = vunpack.c.l.b16 %v442
      %v470 = vunpack.c.h.b16 %v442
      %v471 = vunpack.c.l.b16 %v443
      %v472 = vunpack.c.h.b16 %v443
      %v473 = vunpack.c.l.b16 %v444
      %v474 = vunpack.c.h.b16 %v444
      %v475 = vunpack.c.l.b16 %v445
      %v476 = vunpack.c.h.b16 %v445
      %v477 = vunpack.c.l.b16 %v446
      %v478 = vunpack.c.h.b16 %v446
      %v479 = vunpack.c.l.b16 %v447
      %v480 = vunpack.c.h.b16 %v447
      %v481 = vunpack.c.l.b16 %v448
      %v482 = vunpack.c.h.b16 %v448
      %v483 = vpack.c.b16 %v467, %v465
      %v484 = vpack.c.b16 %v468, %v466
      %v485 = vpack.c.b16 %v471, %v469
      %v486 = vpack.c.b16 %v472, %v470
      %v487 = vpack.c.b16 %v475, %v473
      %v488 = vpack.c.b16 %v476, %v474
      %v489 = vpack.c.b16 %v479, %v477
      %v490 = vpack.c.b16 %v480, %v478
      %v491 = vpack.c.b16 %v481, %v481
      %v492 = vpack.c.b16 %v482, %v482
      %v502 = vsel %vm245, %v455, 0
      %v505 = vsel %vm249, %v491, 0
      %v508 = vsel %vm249, %v492, 0
      %510 = vmatprep.subr.bf16.mxu0 %v484
      %511 = vmatpush1.bf16.msra.mxu0 %v483
      %512 = vmatprep.subr.bf16.mxu0 %v486
      %513 = vmatpush1.bf16.msra.mxu0 %v485
      %514 = vmatprep.subr.bf16.mxu0 %v488
      %515 = vmatpush1.bf16.msra.mxu0 %v487
      %516 = vmatprep.subr.bf16.mxu0 %v490
      %517 = vmatpush1.bf16.msra.mxu0 %v489
      %518 = vmatprep.subr.bf16.mxu0 %v508
      %519 = vmatpush1.bf16.msra.mxu0 %v505
      %520 = vmatprep.subr.bf16.mxu0 0
      %521 = vmatpush1.bf16.msra.mxu0 0
      %522 = vmatprep.subr.bf16.mxu0 0
      %523 = vmatpush1.bf16.msra.mxu0 0
      %524 = vmatprep.subr.bf16.mxu0 0
      %525 = vmatpush1.bf16.msra.mxu0 0
      %526 = vmatprep.subr.bf16.mxu0 0
      %527 = vmatpush1.bf16.msra.mxu0 0
      %528 = vmatprep.subr.bf16.mxu0 0
      %529 = vmatpush1.bf16.msra.mxu0 0
      %530 = vmatprep.subr.bf16.mxu0 0
      %531 = vmatpush1.bf16.msra.mxu0 0
      %532 = vmatprep.subr.bf16.mxu0 0
      %533 = vmatpush1.bf16.msra.mxu0 0
      %534 = vmatprep.subr.bf16.mxu0 0
      %535 = vmatpush1.bf16.msra.mxu0 0
      %536 = vmatprep.subr.bf16.mxu0 0
      %537 = vmatpush1.bf16.msra.mxu0 0
      %538 = vmatprep.subr.bf16.mxu0 0
      %539 = vmatpush1.bf16.msra.mxu0 0
      %540 = vmatprep.subr.bf16.mxu0 0
      %541 = vmatpush1.bf16.msra.mxu0 0
      %542 = vmatprep.mubr.bf16.mxu0 0
      %543 = vmatmul.mubr.bf16.gmra.mrb[0].mxu0 %v502
      %v544 = vpop.f32.mrb[0].mxu0
      %v545 = vadd.f32 0.0, %v544
      %v546 = vpop.f32.mrb[0].mxu0
      %v547 = vadd.f32 0.0, %v546
      %v548 = vpop.f32.mrb[0].mxu0
      %v549 = vadd.f32 0.0, %v548
      %v550 = vpop.f32.mrb[0].mxu0
      %v551 = vadd.f32 0.0, %v550
      %552 = vdwg.mxu0
      %v553 = vadd.f32 %v434, %v545
      %v554 = vadd.f32 %v435, %v547
      %v555 = vadd.f32 %v436, %v549
      %v556 = vadd.f32 %v437, %v551
      %557 = vst [vmem:[%s170] sm:$0xff] %v553
      %558 = vst [vmem:[%s170 + $0x8] sm:$0xff] %v554
      %559 = vst [vmem:[%s170 + $0x10] sm:$0xff] %v555
      %560 = vst [vmem:[%s170 + $0x18] sm:$0xff] %v556
      %p561 = scmp.lt.s32.totalorder %s14, 1
      %s562 = scalar_select %p561, %s14, 1
      %s563 = smul.addr %s562, 4
      %s564 = smul.addr %s563, 8
      %s565 = scalar_lea.vmem %s3, %s564
      // Predicated region
      $region33: #{upsample_ps_forward.1} parent=31 // pred_check
        %p566 = pneg %p100
      $region34: #{upsample_ps_forward.1} parent=31 // pred_check_branch
        %568 = sbr.rel (%p566) target = $region36
      $region35: #{upsample_ps_forward.1} parent=31 // pred_region
        _
      $region36: #{upsample_ps_forward.1} parent=31 // pred_fallthru
        _
    $region32: #{upsample_ps_forward.1} parent=5 // pred_fallthru
      _
    %p569 = scmp.le.s32.totalorder 2, %s9
    // Predicated region
    $region37: #{upsample_ps_forward.1} parent=5 // pred_check
      %p570 = pneg %p569
    $region38: #{upsample_ps_forward.1} parent=5 // pred_check_branch
      %572 = sbr.rel (%p570) target = $region40
    $region39: #{upsample_ps_forward.1} parent=5 // pred_region
      %s573 = ssub.s32 %s9, 2
      // Predicated region
      $region41: #{upsample_ps_forward.1} parent=39 // pred_check
        %p574 = pneg %p106
      $region42: #{upsample_ps_forward.1} parent=39 // pred_check_branch
        %576 = sbr.rel (%p574) target = $region44
      $region43: #{upsample_ps_forward.1} parent=39 // pred_region
        %p577 = scmp.lt.s32.totalorder %s15, 1
        %s578 = scalar_select %p577, %s15, 1
        %s579 = smul.addr %s578, 4
        %s580 = smul.addr %s579, 8
        %s581 = scalar_lea.vmem %s3, %s580
      $region44: #{upsample_ps_forward.1} parent=39 // pred_fallthru
        _
    $region40: #{upsample_ps_forward.1} parent=5 // pred_fallthru
      _
  $region6: #{upsample_ps_forward.1} parent=0 // loop_footer
    %s13 = sadd.s32 1, %s9
  $region7: #{upsample_ps_forward.1} parent=0 // loop_footer_branch
    %8 = sbr.rel target = $region3
  $region8: #{upsample_ps_forward.1} parent=0 // loop_exit
    _

</llo_original>
